<compile_context>
chip_gen: v7x
topology: tpu7x:2x2x1
jax: 0.10.0
libtpu: 0.0.40
codegen_flags: <defaults>
</compile_context>

<pallas_src>
import math

import jax
import jax.numpy as jnp
from jax.experimental import pallas as pl
from jax.experimental.pallas import tpu as pltpu


def _round_up(x, m):
    return ((x + m - 1) // m) * m


def _pick_tile(n_pad, requested, *, min_tiles=1):
    """Largest multiple of 128 that divides n_pad, is <= requested, and (when
    possible) leaves at least `min_tiles` tiles along the axis."""
    requested = max(128, requested)
    units = n_pad // 128
    best = 128
    for d in range(1, units + 1):
        if units % d != 0:
            continue
        tile = d * 128
        if tile <= requested and (units // d) >= min_tiles:
            best = max(best, tile)
    return best


def _make_gcn_kernel(tk, x_resident):
    """One (row-tile, k-tile) step of: out = (adj @ x_aug) @ W_aug^T."""

    def gcn_kernel(adj_ref, x_ref, w_ref, o_ref, agg_acc):
        k = pl.program_id(1)

        @pl.when(k == 0)
        def _():
            agg_acc[...] = jnp.zeros_like(agg_acc)

        if x_resident:
            # x is fully resident; slice the k-th source-node window.
            start = pl.multiple_of(k * tk, 128)
            x_blk = x_ref[pl.ds(start, tk), :]
        else:
            x_blk = x_ref[...]

        # Aggregate neighbor (augmented) features over the source-node axis.
        agg_acc[...] += jnp.dot(
            adj_ref[...], x_blk, preferred_element_type=jnp.float32
        )

        @pl.when(k == pl.num_programs(1) - 1)
        def _():
            # (tm, Fin+1) @ (Fin+1, Fout_pad): W already transposed in the
            # wrapper, so the finalize path never touches the XLU.
            proj = jnp.dot(
                agg_acc[...], w_ref[...], preferred_element_type=jnp.float32
            )
            o_ref[...] = proj.astype(o_ref.dtype)

    return gcn_kernel


def graph_convolution(x, adj, weight, bias=None, *, tm=None, tk=None,
                      stream_dtype=jnp.bfloat16):
    """x: [N, Fin], adj: [N, N] dense, weight: [Fout, Fin] (PyTorch layout), bias: [Fout].

    stream_dtype: dtype used to stream adj/x from HBM (accumulation stays f32).
    Pass jnp.float32 for bit-faithful numerics; default bf16 halves the
    dominant HBM byte stream.
    """
    n, fin = x.shape
    fout = weight.shape[0]
    assert adj.shape == (n, n)

    out_dtype = x.dtype
    stream_dtype = (jnp.dtype(stream_dtype) if stream_dtype is not None
                    else jnp.dtype(adj.dtype))

    # Per-TensorCore VMEM capacity (v5e/v6e: 128 MiB, v7x: 64 MiB).
    try:
        vmem_cap = pltpu.get_tpu_info().vmem_capacity_bytes
    except Exception:
        vmem_cap = 64 << 20  # conservative (v7x) fallback

    if tm is None:
        tm = 512
    if tk is None:
        # Bigger adj tiles on 128 MiB-VMEM chips; keep v7x within budget.
        tk = 4096 if vmem_cap >= (100 << 20) else 2048

    fin_aug = fin + 1                    # ones column carries the bias
    fout_pad = _round_up(fout, 128)      # lane-dense output (unmasked vst)
    n_pad = _round_up(n, 128)

    # Tiles divide n_pad exactly -> no double round-up, and no padded adj copy
    # when N is already 128-aligned. Prefer >= 2 row tiles for 2-TC sharding.
    tm = _pick_tile(n_pad, tm, min_tiles=2)
    tk = _pick_tile(n_pad, tk, min_tiles=1)
    grid = (n_pad // tm, n_pad // tk)

    sbytes = stream_dtype.itemsize
    obytes = jnp.dtype(out_dtype).itemsize

    # adj: single wrapper-side cast; only pad when N is not lane-aligned.
    adj_s = adj.astype(stream_dtype)
    if n_pad != n:
        adj_p = jnp.zeros((n_pad, n_pad), stream_dtype).at[:n, :n].set(adj_s)
    else:
        adj_p = adj_s

    # x augmented with a ones column. Zero-padded rows are harmless because
    # the matching adj columns are zero.
    x_aug = jnp.concatenate([x, jnp.ones((n, 1), x.dtype)], axis=1)
    x_aug = x_aug.astype(stream_dtype)
    if n_pad != n:
        x_p = jnp.zeros((n_pad, fin_aug), stream_dtype).at[:n].set(x_aug)
    else:
        x_p = x_aug

    # W augmented with the bias column, pre-transposed once to [Fin+1, Fout_pad],
    # kept in f32 (tiny, resident) for accurate finalize.
    b = bias if bias is not None else jnp.zeros((fout,), weight.dtype)
    w_aug = jnp.concatenate([weight, b[:, None]], axis=1)          # [Fout, Fin+1]
    w_t = jnp.zeros((fin_aug, fout_pad), jnp.float32).at[:, :fout].set(
        w_aug.T.astype(jnp.float32)
    )

    # x resident in VMEM when small (lane axis pads Fin+1 -> 128).
    x_resident_bytes = n_pad * 128 * sbytes
    x_resident = x_resident_bytes <= (8 << 20)
    if x_resident:
        x_spec = pl.BlockSpec((n_pad, fin_aug), lambda i, k: (0, 0))
        x_vmem = x_resident_bytes
    else:
        x_spec = pl.BlockSpec((tk, fin_aug), lambda i, k: (k, 0))
        x_vmem = 2 * tk * 128 * sbytes

    # Lane-padding-aware VMEM footprint: double-buffered adj + out tiles,
    # x (resident or double-buffered), resident W^T, f32 accumulator.
    need_bytes = (
        2 * tm * tk * sbytes                      # adj tiles (double buffered)
        + x_vmem                                  # x
        + _round_up(fin_aug, 8) * fout_pad * 4    # resident W^T
        + 2 * tm * fout_pad * obytes              # out tiles (double buffered)
        + tm * _round_up(fin_aug, 128) * 4        # agg accumulator
    )
    vmem_limit = min(max(int(1.3 * need_bytes), 16 << 20), int(0.8 * vmem_cap))

    kernel = _make_gcn_kernel(tk, x_resident)

    out_p = pl.pallas_call(
        kernel,
        out_shape=jax.ShapeDtypeStruct((n_pad, fout_pad), out_dtype),
        grid_spec=pltpu.PrefetchScalarGridSpec(
            num_scalar_prefetch=0,
            grid=grid,
            in_specs=[
                pl.BlockSpec((tm, tk), lambda i, k: (i, k)),             # adj tile
                x_spec,                                                  # x (aug)
                pl.BlockSpec((fin_aug, fout_pad), lambda i, k: (0, 0)),  # resident W^T
            ],
            out_specs=pl.BlockSpec((tm, fout_pad), lambda i, k: (i, 0)),
            scratch_shapes=[
                pltpu.VMEM((tm, fin_aug), jnp.float32),  # agg accumulator
            ],
        ),
        compiler_params=pltpu.CompilerParams(
            dimension_semantics=("parallel", "arbitrary"),
            vmem_limit_bytes=vmem_limit,
        ),
    )(adj_p, x_p, w_t)

    return out_p[:n, :fout]


if __name__ == "__main__":
    key = jax.random.PRNGKey(0)
    k_x, k_adj, k_w, k_b = jax.random.split(key, 4)

    N = 16             # number of graph nodes
    IN_FEATURES = 8    # in_features
    OUT_FEATURES = 32  # out_features

    # Parameter init matching the module's init():
    #   W.weight ~ U(-stdv, stdv), stdv = 1/sqrt(in_features)
    #   bias keeps nn.Linear default: U(-1/sqrt(fan_in), 1/sqrt(fan_in))
    stdv = 1.0 / math.sqrt(IN_FEATURES)
    weight = jax.random.uniform(
        k_w, (OUT_FEATURES, IN_FEATURES), jnp.float32, minval=-stdv, maxval=stdv
    )
    bias = jax.random.uniform(
        k_b, (OUT_FEATURES,), jnp.float32, minval=-stdv, maxval=stdv
    )

    # Example inputs: node features + a dense normalized adjacency matrix.
    x = jax.random.normal(k_x, (N, IN_FEATURES), jnp.float32)
    adj_raw = (jax.random.uniform(k_adj, (N, N)) < 0.3).astype(jnp.float32)
    adj = adj_raw + jnp.eye(N, dtype=jnp.float32)        # add self loops
    adj = adj / jnp.sum(adj, axis=1, keepdims=True)      # row-normalize

    # Reference in plain JAX (same math as the PyTorch forward).
    ref = adj @ (x @ weight.T + bias)

    # Exact-dtype path (f32 streaming) — tight tolerance.
    out_f32 = graph_convolution(x, adj, weight, bias, stream_dtype=jnp.float32)
    jax.block_until_ready(out_f32)
    assert out_f32.shape == (N, OUT_FEATURES)
    assert jnp.allclose(out_f32, ref, atol=1e-4, rtol=1e-4)

    # Default bandwidth-optimized path (bf16 streaming, f32 accumulation).
    out_bf16 = graph_convolution(x, adj, weight, bias)
    jax.block_until_ready(out_bf16)
    assert out_bf16.shape == (N, OUT_FEATURES)
    assert jnp.allclose(out_bf16, ref, atol=3e-2, rtol=3e-2)

    print("KERNEL_OK")
</pallas_src>

<mosaic_0001>
module attributes {stable_mosaic.version = 11 : i64} {
  func.func @gcn_kernel(%arg0: i32, %arg1: i32, %arg2: memref<128x128xf32, #tpu.memory_space<vmem>>, %arg3: memref<128x9xf32, #tpu.memory_space<vmem>>, %arg4: memref<9x128xf32, #tpu.memory_space<vmem>>, %arg5: memref<128x128xf32, #tpu.memory_space<vmem>>, %arg6: memref<128x9xf32, #tpu.memory_space<vmem>>) attributes {dimension_semantics = [#tpu.dimension_semantics<parallel>, #tpu.dimension_semantics<arbitrary>], iteration_bounds = array<i64: 1, 1>, scalar_prefetch = 0 : i64, scratch_operands = 1 : i64, tpu.core_type = #tpu.core_type<tc>, window_params = [{transform_indices = @transform_0, window_bounds = array<i64: 128, 128>}, {pipeline_mode = #tpu.pipeline_mode<synchronous>, transform_indices = @transform_1, window_bounds = array<i64: 128, 9>}, {pipeline_mode = #tpu.pipeline_mode<synchronous>, transform_indices = @transform_2, window_bounds = array<i64: 9, 128>}, {transform_indices = @transform_3, window_bounds = array<i64: 128, 128>}]} {
    %c0_i32 = arith.constant 0 : i32
    %0 = arith.cmpi eq, %arg1, %c0_i32 : i32
    %1 = arith.extui %0 : i1 to i32
    %c0_i32_0 = arith.constant 0 : i32
    %2 = arith.cmpi ne, %1, %c0_i32_0 : i32
    scf.if %2 {
      %cst_9 = arith.constant 0.000000e+00 : f32
      %15 = vector.broadcast %cst_9 : f32 to vector<128x9xf32>
      %c0_10 = arith.constant 0 : index
      %c0_11 = arith.constant 0 : index
      %16 = vector.load %arg6[%c0_10, %c0_11] : memref<128x9xf32, #tpu.memory_space<vmem>>, vector<128x9xf32>
      tpu.vector_store %arg6[%c0_10, %c0_11], %15 {strides = array<i32>} : memref<128x9xf32, #tpu.memory_space<vmem>>, vector<128x9xf32>,
    } else {
    }
    %c128_i32 = arith.constant 128 : i32
    %3 = arith.muli %arg1, %c128_i32 : i32
    %4 = tpu.assume_multiple %3, 128 : i32
    %5 = arith.index_cast %4 : i32 to index
    %c0 = arith.constant 0 : index
    %6 = vector.load %arg3[%5, %c0] : memref<128x9xf32, #tpu.memory_space<vmem>>, vector<128x9xf32>
    %c0_1 = arith.constant 0 : index
    %c0_2 = arith.constant 0 : index
    %7 = vector.load %arg6[%c0_1, %c0_2] : memref<128x9xf32, #tpu.memory_space<vmem>>, vector<128x9xf32>
    %c0_3 = arith.constant 0 : index
    %c0_4 = arith.constant 0 : index
    %8 = vector.load %arg2[%c0_3, %c0_4] : memref<128x128xf32, #tpu.memory_space<vmem>>, vector<128x128xf32>
    %cst = arith.constant dense<0.000000e+00> : vector<128x9xf32>
    %9 = tpu.matmul %8, %6, %cst {dimension_numbers = #tpu.dot_dimension_numbers<[1], [0], [0], [1], [0, 0, 1, 1], [], []>} : vector<128x128xf32>, vector<128x9xf32>, vector<128x9xf32> -> vector<128x9xf32>
    %10 = arith.addf %7, %9 : vector<128x9xf32>
    %c0_5 = arith.constant 0 : index
    %c0_6 = arith.constant 0 : index
    %11 = vector.load %arg6[%c0_5, %c0_6] : memref<128x9xf32, #tpu.memory_space<vmem>>, vector<128x9xf32>
    tpu.vector_store %arg6[%c0_5, %c0_6], %10 {strides = array<i32>} : memref<128x9xf32, #tpu.memory_space<vmem>>, vector<128x9xf32>,
    %c0_i32_7 = arith.constant 0 : i32
    %12 = arith.cmpi eq, %arg1, %c0_i32_7 : i32
    %13 = arith.extui %12 : i1 to i32
    %c0_i32_8 = arith.constant 0 : i32
    %14 = arith.cmpi ne, %13, %c0_i32_8 : i32
    scf.if %14 {
      %c0_9 = arith.constant 0 : index
      %c0_10 = arith.constant 0 : index
      %15 = vector.load %arg6[%c0_9, %c0_10] : memref<128x9xf32, #tpu.memory_space<vmem>>, vector<128x9xf32>
      %c0_11 = arith.constant 0 : index
      %c0_12 = arith.constant 0 : index
      %16 = vector.load %arg4[%c0_11, %c0_12] : memref<9x128xf32, #tpu.memory_space<vmem>>, vector<9x128xf32>
      %cst_13 = arith.constant dense<0.000000e+00> : vector<128x128xf32>
      %17 = tpu.matmul %15, %16, %cst_13 {dimension_numbers = #tpu.dot_dimension_numbers<[1], [0], [0], [1], [0, 0, 1, 1], [], []>} : vector<128x9xf32>, vector<9x128xf32>, vector<128x128xf32> -> vector<128x128xf32>
      %c0_14 = arith.constant 0 : index
      %c0_15 = arith.constant 0 : index
      %18 = vector.load %arg5[%c0_14, %c0_15] : memref<128x128xf32, #tpu.memory_space<vmem>>, vector<128x128xf32>
      tpu.vector_store %arg5[%c0_14, %c0_15], %17 {strides = array<i32>} : memref<128x128xf32, #tpu.memory_space<vmem>>, vector<128x128xf32>,
    } else {
    }
    return
  }
  func.func @transform_0(%arg0: i32, %arg1: i32) -> (i32, i32) {
    %c0_i32 = arith.constant 0 : i32
    return %arg0, %arg1 : i32, i32
  }
  func.func @transform_1(%arg0: i32, %arg1: i32) -> (i32, i32) {
    %c0_i32 = arith.constant 0 : i32
    %c0_i32_0 = arith.constant 0 : i32
    %c0_i32_1 = arith.constant 0 : i32
    return %c0_i32, %c0_i32_0 : i32, i32
  }
  func.func @transform_2(%arg0: i32, %arg1: i32) -> (i32, i32) {
    %c0_i32 = arith.constant 0 : i32
    %c0_i32_0 = arith.constant 0 : i32
    %c0_i32_1 = arith.constant 0 : i32
    return %c0_i32, %c0_i32_0 : i32, i32
  }
  func.func @transform_3(%arg0: i32, %arg1: i32) -> (i32, i32) {
    %c0_i32 = arith.constant 0 : i32
    %c0_i32_0 = arith.constant 0 : i32
    return %arg0, %c0_i32 : i32, i32
  }
}

</mosaic_0001>

<llo_original>
// kernel: tpu_custom_call.1
$region0: #{tpu_custom_call.1}
  #allocation0 [shape = 'u32[]', space=smem, size = 0x4, offset = 0x4, fixed_abs, tag = 'smem constant byte address 0x4 - core index']
  #allocation1 [shape = 'u32[144,128]{1,0:T(1,128)}', space=vmem, size = 0x12000, scoped, tag = 'internal scratch']
  #allocation2 [shape = 'f32[128,9]{1,0:T(8,128)}', space=vmem, size = 0x10000, scoped, tag = 'scratch operand']
  %s0 = inlined_call_operand.vmem [shape: f32[128,128], index: 0, kind: input, shape index: {}]
  %s1 = inlined_call_operand.vmem [shape: f32[128,9], index: 1, kind: input, shape index: {}]
  %s2 = inlined_call_operand.vmem [shape: f32[9,128], index: 2, kind: input, shape index: {}]
  %s3 = inlined_call_operand.hbm [shape: f32[128,128], index: 3, kind: output, shape index: {}]
  %s4 = sld [smem:[#allocation0]]
  $region30: #{tpu_custom_call.1} parent=0
    _
  %s6 = ssub.s32 1, %s4
  %s7 = scalar_select 0, %s6, %s4
  $region1: #{tpu_custom_call.1} parent=0
    #allocation3 [shape = 'u8[65536]{0}', space=vmem, size = 0x10000, scoped, tag = 'output window, operand 0, single buffered']
    #allocation4 [shape = 's32[1]{0}', space=sflag, size = 0x4, scoped, tag = 'scoped memory for tpu_custom_call.1']
    %8 = vsyncpa [#allocation4], 0
    // Predicated region
    $region2: #{tpu_custom_call.1} parent=1 // pred_check
      _
    $region3: #{tpu_custom_call.1} parent=1 // pred_check_branch
      %10 = sbr.rel (0) target = $region5
    $region4: #{tpu_custom_call.1} parent=1 // pred_region
      _
    $region5: #{tpu_custom_call.1} parent=1 // pred_fallthru
      _
    // Predicated region
    $region6: #{tpu_custom_call.1} parent=1 // pred_check
      _
    $region7: #{tpu_custom_call.1} parent=1 // pred_check_branch
      %12 = sbr.rel (0) target = $region9
    $region8: #{tpu_custom_call.1} parent=1 // pred_region
      _
    $region9: #{tpu_custom_call.1} parent=1 // pred_fallthru
      _
    // Predicated region
    $region10: #{tpu_custom_call.1} parent=1 // pred_check
      _
    $region11: #{tpu_custom_call.1} parent=1 // pred_check_branch
      %14 = sbr.rel (0) target = $region13
    $region12: #{tpu_custom_call.1} parent=1 // pred_region
      _
    $region13: #{tpu_custom_call.1} parent=1 // pred_fallthru
      _
    %p15 = scmp.eq.s32.totalorder 0, 0
    // Predicated region
    $region14: #{tpu_custom_call.1} parent=1 // pred_check
      %p16 = pneg %p15
    $region15: #{tpu_custom_call.1} parent=1 // pred_check_branch
      %18 = sbr.rel (%p16) target = $region17
    $region16: #{tpu_custom_call.1} parent=1 // pred_region
      %vm19 = vcmask 72704
      %20 = vst.msk [vmem:[#allocation2] sm:$0xff] %vm19, 0.0
      %21 = vst.msk [vmem:[#allocation2 + $0x8] sm:$0xff] %vm19, 0.0
      %22 = vst.msk [vmem:[#allocation2 + $0x10] sm:$0xff] %vm19, 0.0
      %23 = vst.msk [vmem:[#allocation2 + $0x18] sm:$0xff] %vm19, 0.0
      %24 = vst.msk [vmem:[#allocation2 + $0x20] sm:$0xff] %vm19, 0.0
      %25 = vst.msk [vmem:[#allocation2 + $0x28] sm:$0xff] %vm19, 0.0
      %26 = vst.msk [vmem:[#allocation2 + $0x30] sm:$0xff] %vm19, 0.0
      %27 = vst.msk [vmem:[#allocation2 + $0x38] sm:$0xff] %vm19, 0.0
      %28 = vst.msk [vmem:[#allocation2 + $0x40] sm:$0xff] %vm19, 0.0
      %29 = vst.msk [vmem:[#allocation2 + $0x48] sm:$0xff] %vm19, 0.0
      %30 = vst.msk [vmem:[#allocation2 + $0x50] sm:$0xff] %vm19, 0.0
      %31 = vst.msk [vmem:[#allocation2 + $0x58] sm:$0xff] %vm19, 0.0
      %32 = vst.msk [vmem:[#allocation2 + $0x60] sm:$0xff] %vm19, 0.0
      %33 = vst.msk [vmem:[#allocation2 + $0x68] sm:$0xff] %vm19, 0.0
      %34 = vst.msk [vmem:[#allocation2 + $0x70] sm:$0xff] %vm19, 0.0
      %35 = vst.msk [vmem:[#allocation2 + $0x78] sm:$0xff] %vm19, 0.0
    $region17: #{tpu_custom_call.1} parent=1 // pred_fallthru
      _
    %s36 = smul.u32 0, 128
    %s37 = scalar_lea.vmem %s1, %s36
    %v38 = vld [vmem:[%s37] sm:$0xff]
    %v39 = vld [vmem:[%s37 + $0x8] sm:$0xff]
    %v40 = vld [vmem:[%s37 + $0x10] sm:$0xff]
    %v41 = vld [vmem:[%s37 + $0x18] sm:$0xff]
    %v42 = vld [vmem:[%s37 + $0x20] sm:$0xff]
    %v43 = vld [vmem:[%s37 + $0x28] sm:$0xff]
    %v44 = vld [vmem:[%s37 + $0x30] sm:$0xff]
    %v45 = vld [vmem:[%s37 + $0x38] sm:$0xff]
    %v46 = vld [vmem:[%s37 + $0x40] sm:$0xff]
    %v47 = vld [vmem:[%s37 + $0x48] sm:$0xff]
    %v48 = vld [vmem:[%s37 + $0x50] sm:$0xff]
    %v49 = vld [vmem:[%s37 + $0x58] sm:$0xff]
    %v50 = vld [vmem:[%s37 + $0x60] sm:$0xff]
    %v51 = vld [vmem:[%s37 + $0x68] sm:$0xff]
    %v52 = vld [vmem:[%s37 + $0x70] sm:$0xff]
    %v53 = vld [vmem:[%s37 + $0x78] sm:$0xff]
    %v54 = vld [vmem:[#allocation2] sm:$0xff]
    %v55 = vld [vmem:[#allocation2 + $0x8] sm:$0xff]
    %v56 = vld [vmem:[#allocation2 + $0x10] sm:$0xff]
    %v57 = vld [vmem:[#allocation2 + $0x18] sm:$0xff]
    %v58 = vld [vmem:[#allocation2 + $0x20] sm:$0xff]
    %v59 = vld [vmem:[#allocation2 + $0x28] sm:$0xff]
    %v60 = vld [vmem:[#allocation2 + $0x30] sm:$0xff]
    %v61 = vld [vmem:[#allocation2 + $0x38] sm:$0xff]
    %v62 = vld [vmem:[#allocation2 + $0x40] sm:$0xff]
    %v63 = vld [vmem:[#allocation2 + $0x48] sm:$0xff]
    %v64 = vld [vmem:[#allocation2 + $0x50] sm:$0xff]
    %v65 = vld [vmem:[#allocation2 + $0x58] sm:$0xff]
    %v66 = vld [vmem:[#allocation2 + $0x60] sm:$0xff]
    %v67 = vld [vmem:[#allocation2 + $0x68] sm:$0xff]
    %v68 = vld [vmem:[#allocation2 + $0x70] sm:$0xff]
    %v69 = vld [vmem:[#allocation2 + $0x78] sm:$0xff]
    %v70 = vld [vmem:[%s0] sm:$0xff]
    %v71 = vld [vmem:[%s0 + $0x8] sm:$0xff]
    %v72 = vld [vmem:[%s0 + $0x10] sm:$0xff]
    %v73 = vld [vmem:[%s0 + $0x18] sm:$0xff]
    %v74 = vld [vmem:[%s0 + $0x20] sm:$0xff]
    %v75 = vld [vmem:[%s0 + $0x28] sm:$0xff]
    %v76 = vld [vmem:[%s0 + $0x30] sm:$0xff]
    %v77 = vld [vmem:[%s0 + $0x38] sm:$0xff]
    %v78 = vld [vmem:[%s0 + $0x40] sm:$0xff]
    %v79 = vld [vmem:[%s0 + $0x48] sm:$0xff]
    %v80 = vld [vmem:[%s0 + $0x50] sm:$0xff]
    %v81 = vld [vmem:[%s0 + $0x58] sm:$0xff]
    %v82 = vld [vmem:[%s0 + $0x60] sm:$0xff]
    %v83 = vld [vmem:[%s0 + $0x68] sm:$0xff]
    %v84 = vld [vmem:[%s0 + $0x70] sm:$0xff]
    %v85 = vld [vmem:[%s0 + $0x78] sm:$0xff]
    %86 = vmatprep.subr.mxu0 0.0
    %87 = vmatpush1.msra.mxu0 %v38
    %88 = vmatprep.subr.mxu0 0.0
    %89 = vmatpush1.msra.mxu0 %v39
    %90 = vmatprep.subr.mxu0 0.0
    %91 = vmatpush1.msra.mxu0 %v40
    %92 = vmatprep.subr.mxu0 0.0
    %93 = vmatpush1.msra.mxu0 %v41
    %94 = vmatprep.subr.mxu0 0.0
    %95 = vmatpush1.msra.mxu0 %v42
    %96 = vmatprep.subr.mxu0 0.0
    %97 = vmatpush1.msra.mxu0 %v43
    %98 = vmatprep.subr.mxu0 0.0
    %99 = vmatpush1.msra.mxu0 %v44
    %100 = vmatprep.subr.mxu0 0.0
    %101 = vmatpush1.msra.mxu0 %v45
    %102 = vmatprep.subr.mxu0 0.0
    %103 = vmatpush1.msra.mxu0 %v46
    %104 = vmatprep.subr.mxu0 0.0
    %105 = vmatpush1.msra.mxu0 %v47
    %106 = vmatprep.subr.mxu0 0.0
    %107 = vmatpush1.msra.mxu0 %v48
    %108 = vmatprep.subr.mxu0 0.0
    %109 = vmatpush1.msra.mxu0 %v49
    %110 = vmatprep.subr.mxu0 0.0
    %111 = vmatpush1.msra.mxu0 %v50
    %112 = vmatprep.subr.mxu0 0.0
    %113 = vmatpush1.msra.mxu0 %v51
    %114 = vmatprep.subr.mxu0 0.0
    %115 = vmatpush1.msra.mxu0 %v52
    %116 = vmatprep.subr.mxu0 0.0
    %117 = vmatpush1.msra.mxu0 %v53
    %118 = vmatprep.subr.mxu0 0.0
    %119 = vmatpush1.msra.mxu0 0.0
    %120 = vmatprep.subr.mxu0 0.0
    %121 = vmatpush1.msra.mxu0 0.0
    %122 = vmatprep.subr.mxu0 0.0
    %123 = vmatpush1.msra.mxu0 0.0
    %124 = vmatprep.subr.mxu0 0.0
    %125 = vmatpush1.msra.mxu0 0.0
    %126 = vmatprep.subr.mxu0 0.0
    %127 = vmatpush1.msra.mxu0 0.0
    %128 = vmatprep.subr.mxu0 0.0
    %129 = vmatpush1.msra.mxu0 0.0
    %130 = vmatprep.subr.mxu0 0.0
    %131 = vmatpush1.msra.mxu0 0.0
    %132 = vmatprep.subr.mxu0 0.0
    %133 = vmatpush1.msra.mxu0 0.0
    %134 = vmatprep.subr.mxu0 0.0
    %135 = vmatpush1.msra.mxu0 0.0
    %136 = vmatprep.subr.mxu0 0.0
    %137 = vmatpush1.msra.mxu0 0.0
    %138 = vmatprep.subr.mxu0 0.0
    %139 = vmatpush1.msra.mxu0 0.0
    %140 = vmatprep.subr.mxu0 0.0
    %141 = vmatpush1.msra.mxu0 0.0
    %142 = vmatprep.subr.mxu0 0.0
    %143 = vmatpush1.msra.mxu0 0.0
    %144 = vmatprep.subr.mxu0 0.0
    %145 = vmatpush1.msra.mxu0 0.0
    %146 = vmatprep.subr.mxu0 0.0
    %147 = vmatpush1.msra.mxu0 0.0
    %148 = vmatprep.subr.mxu0 0.0
    %149 = vmatpush1.msra.mxu0 0.0
    %150 = vmatprep.mubr.f32.mxu0 0.0
    %151 = vmatmul.mubr.f32.gmra.mrb[0].mxu0 %v70
    %v152 = vpop.f32.mrb[0].mxu0
    %v153 = vadd.f32 0.0, %v152
    %v154 = vpop.f32.mrb[0].mxu0
    %155 = vmatprep.mubr.f32.mxu0 0.0
    %156 = vmatmul.mubr.f32.gmra.mrb[0].mxu0 %v71
    %v157 = vpop.f32.mrb[0].mxu0
    %v158 = vadd.f32 0.0, %v157
    %v159 = vpop.f32.mrb[0].mxu0
    %160 = vmatprep.mubr.f32.mxu0 0.0
    %161 = vmatmul.mubr.f32.gmra.mrb[0].mxu0 %v72
    %v162 = vpop.f32.mrb[0].mxu0
    %v163 = vadd.f32 0.0, %v162
    %v164 = vpop.f32.mrb[0].mxu0
    %165 = vmatprep.mubr.f32.mxu0 0.0
    %166 = vmatmul.mubr.f32.gmra.mrb[0].mxu0 %v73
    %v167 = vpop.f32.mrb[0].mxu0
    %v168 = vadd.f32 0.0, %v167
    %v169 = vpop.f32.mrb[0].mxu0
    %170 = vmatprep.mubr.f32.mxu0 0.0
    %171 = vmatmul.mubr.f32.gmra.mrb[0].mxu0 %v74
    %v172 = vpop.f32.mrb[0].mxu0
    %v173 = vadd.f32 0.0, %v172
    %v174 = vpop.f32.mrb[0].mxu0
    %175 = vmatprep.mubr.f32.mxu0 0.0
    %176 = vmatmul.mubr.f32.gmra.mrb[0].mxu0 %v75
    %v177 = vpop.f32.mrb[0].mxu0
    %v178 = vadd.f32 0.0, %v177
    %v179 = vpop.f32.mrb[0].mxu0
    %180 = vmatprep.mubr.f32.mxu0 0.0
    %181 = vmatmul.mubr.f32.gmra.mrb[0].mxu0 %v76
    %v182 = vpop.f32.mrb[0].mxu0
    %v183 = vadd.f32 0.0, %v182
    %v184 = vpop.f32.mrb[0].mxu0
    %185 = vmatprep.mubr.f32.mxu0 0.0
    %186 = vmatmul.mubr.f32.gmra.mrb[0].mxu0 %v77
    %v187 = vpop.f32.mrb[0].mxu0
    %v188 = vadd.f32 0.0, %v187
    %v189 = vpop.f32.mrb[0].mxu0
    %190 = vmatprep.mubr.f32.mxu0 0.0
    %191 = vmatmul.mubr.f32.gmra.mrb[0].mxu0 %v78
    %v192 = vpop.f32.mrb[0].mxu0
    %v193 = vadd.f32 0.0, %v192
    %v194 = vpop.f32.mrb[0].mxu0
    %195 = vmatprep.mubr.f32.mxu0 0.0
    %196 = vmatmul.mubr.f32.gmra.mrb[0].mxu0 %v79
    %v197 = vpop.f32.mrb[0].mxu0
    %v198 = vadd.f32 0.0, %v197
    %v199 = vpop.f32.mrb[0].mxu0
    %200 = vmatprep.mubr.f32.mxu0 0.0
    %201 = vmatmul.mubr.f32.gmra.mrb[0].mxu0 %v80
    %v202 = vpop.f32.mrb[0].mxu0
    %v203 = vadd.f32 0.0, %v202
    %v204 = vpop.f32.mrb[0].mxu0
    %205 = vmatprep.mubr.f32.mxu0 0.0
    %206 = vmatmul.mubr.f32.gmra.mrb[0].mxu0 %v81
    %v207 = vpop.f32.mrb[0].mxu0
    %v208 = vadd.f32 0.0, %v207
    %v209 = vpop.f32.mrb[0].mxu0
    %210 = vmatprep.mubr.f32.mxu0 0.0
    %211 = vmatmul.mubr.f32.gmra.mrb[0].mxu0 %v82
    %v212 = vpop.f32.mrb[0].mxu0
    %v213 = vadd.f32 0.0, %v212
    %v214 = vpop.f32.mrb[0].mxu0
    %215 = vmatprep.mubr.f32.mxu0 0.0
    %216 = vmatmul.mubr.f32.gmra.mrb[0].mxu0 %v83
    %v217 = vpop.f32.mrb[0].mxu0
    %v218 = vadd.f32 0.0, %v217
    %v219 = vpop.f32.mrb[0].mxu0
    %220 = vmatprep.mubr.f32.mxu0 0.0
    %221 = vmatmul.mubr.f32.gmra.mrb[0].mxu0 %v84
    %v222 = vpop.f32.mrb[0].mxu0
    %v223 = vadd.f32 0.0, %v222
    %v224 = vpop.f32.mrb[0].mxu0
    %225 = vmatprep.mubr.f32.mxu0 0.0
    %226 = vmatmul.mubr.f32.gmra.mrb[0].mxu0 %v85
    %v227 = vpop.f32.mrb[0].mxu0
    %v228 = vadd.f32 0.0, %v227
    %v229 = vpop.f32.mrb[0].mxu0
    %230 = vdwg.mxu0
    %v231 = vadd.f32 %v54, %v153
    %v232 = vadd.f32 %v55, %v158
    %v233 = vadd.f32 %v56, %v163
    %v234 = vadd.f32 %v57, %v168
    %v235 = vadd.f32 %v58, %v173
    %v236 = vadd.f32 %v59, %v178
    %v237 = vadd.f32 %v60, %v183
    %v238 = vadd.f32 %v61, %v188
    %v239 = vadd.f32 %v62, %v193
    %v240 = vadd.f32 %v63, %v198
    %v241 = vadd.f32 %v64, %v203
    %v242 = vadd.f32 %v65, %v208
    %v243 = vadd.f32 %v66, %v213
    %v244 = vadd.f32 %v67, %v218
    %v245 = vadd.f32 %v68, %v223
    %v246 = vadd.f32 %v69, %v228
    %vm247 = vcmask 72704
    %248 = vst.msk [vmem:[#allocation2] sm:$0xff] %vm247, %v231
    %249 = vst.msk [vmem:[#allocation2 + $0x8] sm:$0xff] %vm247, %v232
    %250 = vst.msk [vmem:[#allocation2 + $0x10] sm:$0xff] %vm247, %v233
    %251 = vst.msk [vmem:[#allocation2 + $0x18] sm:$0xff] %vm247, %v234
    %252 = vst.msk [vmem:[#allocation2 + $0x20] sm:$0xff] %vm247, %v235
    %253 = vst.msk [vmem:[#allocation2 + $0x28] sm:$0xff] %vm247, %v236
    %254 = vst.msk [vmem:[#allocation2 + $0x30] sm:$0xff] %vm247, %v237
    %255 = vst.msk [vmem:[#allocation2 + $0x38] sm:$0xff] %vm247, %v238
    %256 = vst.msk [vmem:[#allocation2 + $0x40] sm:$0xff] %vm247, %v239
    %257 = vst.msk [vmem:[#allocation2 + $0x48] sm:$0xff] %vm247, %v240
    %258 = vst.msk [vmem:[#allocation2 + $0x50] sm:$0xff] %vm247, %v241
    %259 = vst.msk [vmem:[#allocation2 + $0x58] sm:$0xff] %vm247, %v242
    %260 = vst.msk [vmem:[#allocation2 + $0x60] sm:$0xff] %vm247, %v243
    %261 = vst.msk [vmem:[#allocation2 + $0x68] sm:$0xff] %vm247, %v244
    %262 = vst.msk [vmem:[#allocation2 + $0x70] sm:$0xff] %vm247, %v245
    %263 = vst.msk [vmem:[#allocation2 + $0x78] sm:$0xff] %vm247, %v246
    // Predicated region
    $region18: #{tpu_custom_call.1} parent=1 // pred_check
      %p264 = pneg %p15
    $region19: #{tpu_custom_call.1} parent=1 // pred_check_branch
      %266 = sbr.rel (%p264) target = $region21
    $region20: #{tpu_custom_call.1} parent=1 // pred_region
      %v267 = vld [vmem:[#allocation2] sm:$0xff]
      %v268 = vld [vmem:[#allocation2 + $0x8] sm:$0xff]
      %v269 = vld [vmem:[#allocation2 + $0x10] sm:$0xff]
      %v270 = vld [vmem:[#allocation2 + $0x18] sm:$0xff]
      %v271 = vld [vmem:[#allocation2 + $0x20] sm:$0xff]
      %v272 = vld [vmem:[#allocation2 + $0x28] sm:$0xff]
      %v273 = vld [vmem:[#allocation2 + $0x30] sm:$0xff]
      %v274 = vld [vmem:[#allocation2 + $0x38] sm:$0xff]
      %v275 = vld [vmem:[#allocation2 + $0x40] sm:$0xff]
      %v276 = vld [vmem:[#allocation2 + $0x48] sm:$0xff]
      %v277 = vld [vmem:[#allocation2 + $0x50] sm:$0xff]
      %v278 = vld [vmem:[#allocation2 + $0x58] sm:$0xff]
      %v279 = vld [vmem:[#allocation2 + $0x60] sm:$0xff]
      %v280 = vld [vmem:[#allocation2 + $0x68] sm:$0xff]
      %v281 = vld [vmem:[#allocation2 + $0x70] sm:$0xff]
      %v282 = vld [vmem:[#allocation2 + $0x78] sm:$0xff]
      %v283 = vld [vmem:[%s2] sm:$0xff]
      %v284 = vld [vmem:[%s2 + $0x8] sm:$0x1]
      %v286 = vsel %vm247, %v267, 0
      %v289 = vsel %vm247, %v268, 0
      %v292 = vsel %vm247, %v269, 0
      %v295 = vsel %vm247, %v270, 0
      %v298 = vsel %vm247, %v271, 0
      %v301 = vsel %vm247, %v272, 0
      %v304 = vsel %vm247, %v273, 0
      %v307 = vsel %vm247, %v274, 0
      %v310 = vsel %vm247, %v275, 0
      %v313 = vsel %vm247, %v276, 0
      %v316 = vsel %vm247, %v277, 0
      %v319 = vsel %vm247, %v278, 0
      %v322 = vsel %vm247, %v279, 0
      %v325 = vsel %vm247, %v280, 0
      %v328 = vsel %vm247, %v281, 0
      %v331 = vsel %vm247, %v282, 0
      %vm333 = vcmask 1040384
      %v335 = vsel %vm333, %v284, 0
      %337 = vmatprep.subr.mxu0 0.0
      %338 = vmatpush1.msra.mxu0 %v283
      %339 = vmatprep.subr.mxu0 0.0
      %340 = vmatpush1.msra.mxu0 %v335
      %341 = vmatprep.subr.mxu0 0.0
      %342 = vmatpush1.msra.mxu0 0.0
      %343 = vmatprep.subr.mxu0 0.0
      %344 = vmatpush1.msra.mxu0 0.0
      %345 = vmatprep.subr.mxu0 0.0
      %346 = vmatpush1.msra.mxu0 0.0
      %347 = vmatprep.subr.mxu0 0.0
      %348 = vmatpush1.msra.mxu0 0.0
      %349 = vmatprep.subr.mxu0 0.0
      %350 = vmatpush1.msra.mxu0 0.0
      %351 = vmatprep.subr.mxu0 0.0
      %352 = vmatpush1.msra.mxu0 0.0
      %353 = vmatprep.subr.mxu0 0.0
      %354 = vmatpush1.msra.mxu0 0.0
      %355 = vmatprep.subr.mxu0 0.0
      %356 = vmatpush1.msra.mxu0 0.0
      %357 = vmatprep.subr.mxu0 0.0
      %358 = vmatpush1.msra.mxu0 0.0
      %359 = vmatprep.subr.mxu0 0.0
      %360 = vmatpush1.msra.mxu0 0.0
      %361 = vmatprep.subr.mxu0 0.0
      %362 = vmatpush1.msra.mxu0 0.0
      %363 = vmatprep.subr.mxu0 0.0
      %364 = vmatpush1.msra.mxu0 0.0
      %365 = vmatprep.subr.mxu0 0.0
      %366 = vmatpush1.msra.mxu0 0.0
      %367 = vmatprep.subr.mxu0 0.0
      %368 = vmatpush1.msra.mxu0 0.0
      %369 = vmatprep.subr.mxu0 0.0
      %370 = vmatpush1.msra.mxu0 0.0
      %371 = vmatprep.subr.mxu0 0.0
      %372 = vmatpush1.msra.mxu0 0.0
      %373 = vmatprep.subr.mxu0 0.0
      %374 = vmatpush1.msra.mxu0 0.0
      %375 = vmatprep.subr.mxu0 0.0
      %376 = vmatpush1.msra.mxu0 0.0
      %377 = vmatprep.subr.mxu0 0.0
      %378 = vmatpush1.msra.mxu0 0.0
      %379 = vmatprep.subr.mxu0 0.0
      %380 = vmatpush1.msra.mxu0 0.0
      %381 = vmatprep.subr.mxu0 0.0
      %382 = vmatpush1.msra.mxu0 0.0
      %383 = vmatprep.subr.mxu0 0.0
      %384 = vmatpush1.msra.mxu0 0.0
      %385 = vmatprep.subr.mxu0 0.0
      %386 = vmatpush1.msra.mxu0 0.0
      %387 = vmatprep.subr.mxu0 0.0
      %388 = vmatpush1.msra.mxu0 0.0
      %389 = vmatprep.subr.mxu0 0.0
      %390 = vmatpush1.msra.mxu0 0.0
      %391 = vmatprep.subr.mxu0 0.0
      %392 = vmatpush1.msra.mxu0 0.0
      %393 = vmatprep.subr.mxu0 0.0
      %394 = vmatpush1.msra.mxu0 0.0
      %395 = vmatprep.subr.mxu0 0.0
      %396 = vmatpush1.msra.mxu0 0.0
      %397 = vmatprep.subr.mxu0 0.0
      %398 = vmatpush1.msra.mxu0 0.0
      %399 = vmatprep.subr.mxu0 0.0
      %400 = vmatpush1.msra.mxu0 0.0
      %401 = vmatprep.mubr.f32.mxu0 0.0
      %402 = vmatmul.mubr.f32.gmra.mrb[0].mxu0 %v286
      %v403 = vpop.f32.mrb[0].mxu0
      %v404 = vadd.f32 0.0, %v403
      %v405 = vpop.f32.mrb[0].mxu0
      %406 = vmatprep.mubr.f32.mxu0 0.0
      %407 = vmatmul.mubr.f32.gmra.mrb[0].mxu0 %v289
      %v408 = vpop.f32.mrb[0].mxu0
      %v409 = vadd.f32 0.0, %v408
      %v410 = vpop.f32.mrb[0].mxu0
      %411 = vmatprep.mubr.f32.mxu0 0.0
      %412 = vmatmul.mubr.f32.gmra.mrb[0].mxu0 %v292
      %v413 = vpop.f32.mrb[0].mxu0
      %v414 = vadd.f32 0.0, %v413
      %v415 = vpop.f32.mrb[0].mxu0
      %416 = vmatprep.mubr.f32.mxu0 0.0
      %417 = vmatmul.mubr.f32.gmra.mrb[0].mxu0 %v295
      %v418 = vpop.f32.mrb[0].mxu0
      %v419 = vadd.f32 0.0, %v418
      %v420 = vpop.f32.mrb[0].mxu0
      %421 = vmatprep.mubr.f32.mxu0 0.0
      %422 = vmatmul.mubr.f32.gmra.mrb[0].mxu0 %v298
      %v423 = vpop.f32.mrb[0].mxu0
      %v424 = vadd.f32 0.0, %v423
      %v425 = vpop.f32.mrb[0].mxu0
      %426 = vmatprep.mubr.f32.mxu0 0.0
      %427 = vmatmul.mubr.f32.gmra.mrb[0].mxu0 %v301
      %v428 = vpop.f32.mrb[0].mxu0
      %v429 = vadd.f32 0.0, %v428
      %v430 = vpop.f32.mrb[0].mxu0
      %431 = vmatprep.mubr.f32.mxu0 0.0
      %432 = vmatmul.mubr.f32.gmra.mrb[0].mxu0 %v304
      %v433 = vpop.f32.mrb[0].mxu0
      %v434 = vadd.f32 0.0, %v433
      %v435 = vpop.f32.mrb[0].mxu0
      %436 = vmatprep.mubr.f32.mxu0 0.0
      %437 = vmatmul.mubr.f32.gmra.mrb[0].mxu0 %v307
      %v438 = vpop.f32.mrb[0].mxu0
      %v439 = vadd.f32 0.0, %v438
      %v440 = vpop.f32.mrb[0].mxu0
      %441 = vmatprep.mubr.f32.mxu0 0.0
      %442 = vmatmul.mubr.f32.gmra.mrb[0].mxu0 %v310
      %v443 = vpop.f32.mrb[0].mxu0
      %v444 = vadd.f32 0.0, %v443
      %v445 = vpop.f32.mrb[0].mxu0
      %446 = vmatprep.mubr.f32.mxu0 0.0
      %447 = vmatmul.mubr.f32.gmra.mrb[0].mxu0 %v313
      %v448 = vpop.f32.mrb[0].mxu0
      %v449 = vadd.f32 0.0, %v448
      %v450 = vpop.f32.mrb[0].mxu0
      %451 = vmatprep.mubr.f32.mxu0 0.0
      %452 = vmatmul.mubr.f32.gmra.mrb[0].mxu0 %v316
      %v453 = vpop.f32.mrb[0].mxu0
      %v454 = vadd.f32 0.0, %v453
      %v455 = vpop.f32.mrb[0].mxu0
      %456 = vmatprep.mubr.f32.mxu0 0.0
      %457 = vmatmul.mubr.f32.gmra.mrb[0].mxu0 %v319
      %v458 = vpop.f32.mrb[0].mxu0
      %v459 = vadd.f32 0.0, %v458
      %v460 = vpop.f32.mrb[0].mxu0
      %461 = vmatprep.mubr.f32.mxu0 0.0
      %462 = vmatmul.mubr.f32.gmra.mrb[0].mxu0 %v322
      %v463 = vpop.f32.mrb[0].mxu0
      %v464 = vadd.f32 0.0, %v463
      %v465 = vpop.f32.mrb[0].mxu0
      %466 = vmatprep.mubr.f32.mxu0 0.0
      %467 = vmatmul.mubr.f32.gmra.mrb[0].mxu0 %v325
      %v468 = vpop.f32.mrb[0].mxu0
      %v469 = vadd.f32 0.0, %v468
      %v470 = vpop.f32.mrb[0].mxu0
      %471 = vmatprep.mubr.f32.mxu0 0.0
      %472 = vmatmul.mubr.f32.gmra.mrb[0].mxu0 %v328
      %v473 = vpop.f32.mrb[0].mxu0
      %v474 = vadd.f32 0.0, %v473
      %v475 = vpop.f32.mrb[0].mxu0
      %476 = vmatprep.mubr.f32.mxu0 0.0
      %477 = vmatmul.mubr.f32.gmra.mrb[0].mxu0 %v331
      %v478 = vpop.f32.mrb[0].mxu0
      %v479 = vadd.f32 0.0, %v478
      %v480 = vpop.f32.mrb[0].mxu0
      %481 = vdwg.mxu0
      %482 = vst [vmem:[#allocation3] sm:$0xff] %v404
      %483 = vst [vmem:[#allocation3 + $0x8] sm:$0xff] %v409
      %484 = vst [vmem:[#allocation3 + $0x10] sm:$0xff] %v414
      %485 = vst [vmem:[#allocation3 + $0x18] sm:$0xff] %v419
      %486 = vst [vmem:[#allocation3 + $0x20] sm:$0xff] %v424
      %487 = vst [vmem:[#allocation3 + $0x28] sm:$0xff] %v429
      %488 = vst [vmem:[#allocation3 + $0x30] sm:$0xff] %v434
      %489 = vst [vmem:[#allocation3 + $0x38] sm:$0xff] %v439
      %490 = vst [vmem:[#allocation3 + $0x40] sm:$0xff] %v444
      %491 = vst [vmem:[#allocation3 + $0x48] sm:$0xff] %v449
      %492 = vst [vmem:[#allocation3 + $0x50] sm:$0xff] %v454
      %493 = vst [vmem:[#allocation3 + $0x58] sm:$0xff] %v459
      %494 = vst [vmem:[#allocation3 + $0x60] sm:$0xff] %v464
      %495 = vst [vmem:[#allocation3 + $0x68] sm:$0xff] %v469
      %496 = vst [vmem:[#allocation3 + $0x70] sm:$0xff] %v474
      %497 = vst [vmem:[#allocation3 + $0x78] sm:$0xff] %v479
    $region21: #{tpu_custom_call.1} parent=1 // pred_fallthru
      _
    // Predicated region
    $region22: #{tpu_custom_call.1} parent=1 // pred_check
      _
    $region23: #{tpu_custom_call.1} parent=1 // pred_check_branch
      %499 = sbr.rel (0) target = $region25
    $region24: #{tpu_custom_call.1} parent=1 // pred_region
      %s501 = ssub.s32 2048, 2048
      %502 = vsyncadd [#allocation4], %s501
      %s503 = sshll.u32 [#allocation3], 4
      %s504 = int_to_ptr.vmem [resolvable:$true] %s503
      %509 = dma.vmem_to_hbm [thread:$0]  %s504, 2048, %s3, [#allocation4], 128, 128, 8
    $region25: #{tpu_custom_call.1} parent=1 // pred_fallthru
      _
    // Predicated region
    $region26: #{tpu_custom_call.1} parent=1 // pred_check
      _
    $region27: #{tpu_custom_call.1} parent=1 // pred_check_branch
      %511 = sbr.rel (0) target = $region29
    $region28: #{tpu_custom_call.1} parent=1 // pred_region
      %512 = dma.done [#allocation4], 2048
    $region29: #{tpu_custom_call.1} parent=1 // pred_fallthru
      _
    %513 = vsyncpa [#allocation4], 1

</llo_original>
